<compile_context>
chip_gen: v6e
topology: v6e:2x2x1
jax: 0.10.0
libtpu: 0.0.40
codegen_flags: <defaults>
</compile_context>

<pallas_src>
import jax
import jax.numpy as jnp
from jax.experimental import pallas as pl
from jax.experimental.pallas import tpu as pltpu


# ----------------------------------------------------------------------------
# Generic tiled dense kernel: y = x @ W + b   (bf16 matmul, f32 accumulate)
# Used for the hoisted LSTM-1 input projection.
# ----------------------------------------------------------------------------
def dense_kernel(x_ref, w_ref, b_ref, o_ref):
    x = x_ref[...].astype(jnp.bfloat16)
    o_ref[...] = (jnp.dot(x, w_ref[...], preferred_element_type=jnp.float32)
                  + b_ref[...])


def dense_bias(x, w, b, *, tm=256, tn=256):
    """x: (M, K) f32, w: (K, N) bf16, b: (1, N) f32 -> (M, N) f32."""
    M, K = x.shape
    N = w.shape[1]
    tm = tm if M % tm == 0 else M          # fall back to full dim if not tileable
    tn = tn if N % tn == 0 else N
    return pl.pallas_call(
        dense_kernel,
        out_shape=jax.ShapeDtypeStruct((M, N), jnp.float32),
        grid_spec=pltpu.PrefetchScalarGridSpec(
            num_scalar_prefetch=0,
            grid=(M // tm, N // tn),
            in_specs=[
                pl.BlockSpec((tm, K), lambda i, j: (i, 0)),
                pl.BlockSpec((K, tn), lambda i, j: (0, j)),
                pl.BlockSpec((1, tn), lambda i, j: (0, j)),
            ],
            out_specs=pl.BlockSpec((tm, tn), lambda i, j: (i, j)),
        ),
        compiler_params=pltpu.CompilerParams(
            dimension_semantics=("parallel", "parallel"),
            vmem_limit_bytes=32 * 1024 * 1024,
        ),
    )(x, w, b)


# ----------------------------------------------------------------------------
# Fused two-layer LSTM recurrence.  Grid = (T,), state carried in VMEM.
# Layer 1's input projection is precomputed (gx_ref); only the recurrent
# matmuls run inside the serial loop.  PyTorch gate order: i, f, g, o.
# ----------------------------------------------------------------------------
def lstm2_kernel(gx_ref, whh1_ref, wih2_ref, whh2_ref, b2_ref, out_ref,
                 h1, c1, h2, c2):
    t = pl.program_id(0)

    @pl.when(t == 0)
    def _():
        h1[...] = jnp.zeros_like(h1)
        c1[...] = jnp.zeros_like(c1)
        h2[...] = jnp.zeros_like(h2)
        c2[...] = jnp.zeros_like(c2)

    H = h1.shape[1]

    def sigmoid(v):
        # divide -> EUP approx reciprocal (keeps it off the VALU)
        return pl.reciprocal(1.0 + jnp.exp(-v), approx=True)

    def split(g):
        # H is a multiple of 128 -> these slices are lane-aligned (free views).
        return g[:, 0:H], g[:, H:2 * H], g[:, 2 * H:3 * H], g[:, 3 * H:4 * H]

    # ---- layer 1 (input projection hoisted) ----
    g1 = gx_ref[0] + jnp.dot(h1[...].astype(jnp.bfloat16), whh1_ref[...],
                             preferred_element_type=jnp.float32)
    i1, f1, gg1, o1 = split(g1)
    c1_new = sigmoid(f1) * c1[...] + sigmoid(i1) * jnp.tanh(gg1)
    h1_new = sigmoid(o1) * jnp.tanh(c1_new)
    c1[...] = c1_new
    h1[...] = h1_new

    # ---- layer 2 (input is layer-1 hidden, so its input proj stays in-loop) ----
    g2 = (b2_ref[...]
          + jnp.dot(h1_new.astype(jnp.bfloat16), wih2_ref[...],
                    preferred_element_type=jnp.float32)
          + jnp.dot(h2[...].astype(jnp.bfloat16), whh2_ref[...],
                    preferred_element_type=jnp.float32))
    i2, f2, gg2, o2 = split(g2)
    c2_new = sigmoid(f2) * c2[...] + sigmoid(i2) * jnp.tanh(gg2)
    h2_new = sigmoid(o2) * jnp.tanh(c2_new)
    c2[...] = c2_new
    h2[...] = h2_new

    out_ref[0] = h2_new


def lstm2_layers(gates_x1, whh1_t, wih2_t, whh2_t, b2):
    """gates_x1: (T, B, 4H) f32 (bias folded in). Weights bf16 (H, 4H)."""
    T, B, G = gates_x1.shape
    H = G // 4
    return pl.pallas_call(
        lstm2_kernel,
        out_shape=jax.ShapeDtypeStruct((T, B, H), jnp.float32),
        grid_spec=pltpu.PrefetchScalarGridSpec(
            num_scalar_prefetch=0,
            grid=(T,),
            in_specs=[
                pl.BlockSpec((1, B, G), lambda t: (t, 0, 0)),
                pl.BlockSpec((H, G), lambda t: (0, 0)),
                pl.BlockSpec((H, G), lambda t: (0, 0)),
                pl.BlockSpec((H, G), lambda t: (0, 0)),
                pl.BlockSpec((1, G), lambda t: (0, 0)),
            ],
            out_specs=pl.BlockSpec((1, B, H), lambda t: (t, 0, 0)),
            scratch_shapes=[
                pltpu.VMEM((B, H), jnp.float32),   # h1
                pltpu.VMEM((B, H), jnp.float32),   # c1
                pltpu.VMEM((B, H), jnp.float32),   # h2
                pltpu.VMEM((B, H), jnp.float32),   # c2
            ],
        ),
        compiler_params=pltpu.CompilerParams(
            dimension_semantics=("arbitrary",),        # serial recurrence
            vmem_limit_bytes=32 * 1024 * 1024,
        ),
    )(gates_x1, whh1_t, wih2_t, whh2_t, b2)


# ----------------------------------------------------------------------------
# Fused two-layer projection: logits = (x @ W1 + b1) @ W2 + b2, tiled over
# (rows, vocab).  The small (TM, Hh) intermediate is recomputed per V-tile.
# ----------------------------------------------------------------------------
def proj_kernel(x_ref, w1_ref, b1_ref, w2_ref, b2_ref, o_ref):
    x = x_ref[...].astype(jnp.bfloat16)
    h = jnp.dot(x, w1_ref[...], preferred_element_type=jnp.float32) + b1_ref[...]
    o_ref[...] = (jnp.dot(h.astype(jnp.bfloat16), w2_ref[...],
                          preferred_element_type=jnp.float32) + b2_ref[...])


def proj2(x, w1, b1, w2, b2, *, tm=256, tv=256):
    """x: (M, H) f32, w1: (H, Hh) bf16, w2: (Hh, V) bf16 -> (M, V) f32."""
    M, H = x.shape
    Hh = w1.shape[1]
    V = w2.shape[1]
    tm = tm if M % tm == 0 else M
    tv = tv if V % tv == 0 else V
    return pl.pallas_call(
        proj_kernel,
        out_shape=jax.ShapeDtypeStruct((M, V), jnp.float32),
        grid_spec=pltpu.PrefetchScalarGridSpec(
            num_scalar_prefetch=0,
            grid=(M // tm, V // tv),
            in_specs=[
                pl.BlockSpec((tm, H), lambda i, j: (i, 0)),
                pl.BlockSpec((H, Hh), lambda i, j: (0, 0)),
                pl.BlockSpec((1, Hh), lambda i, j: (0, 0)),
                pl.BlockSpec((Hh, tv), lambda i, j: (0, j)),
                pl.BlockSpec((1, tv), lambda i, j: (0, j)),
            ],
            out_specs=pl.BlockSpec((tm, tv), lambda i, j: (i, j)),
        ),
        compiler_params=pltpu.CompilerParams(
            dimension_semantics=("parallel", "parallel"),
            vmem_limit_bytes=32 * 1024 * 1024,
        ),
    )(x, w1, b1, w2, b2)


# ----------------------------------------------------------------------------
# Parameter prep (done once): transpose to matmul-friendly layout, cast to
# bf16, combine LSTM biases.
# ----------------------------------------------------------------------------
def prepare_params(params):
    bf = jnp.bfloat16
    return {
        "embedding": params["embedding"],                              # (V, E) f32
        "wih1_t": params["w_ih1"].T.astype(bf),                        # (E, 4H)
        "whh1_t": params["w_hh1"].T.astype(bf),                        # (H, 4H)
        "b1_comb": (params["b_ih1"] + params["b_hh1"]).reshape(1, -1), # (1, 4H) f32
        "wih2_t": params["w_ih2"].T.astype(bf),
        "whh2_t": params["w_hh2"].T.astype(bf),
        "b2_comb": (params["b_ih2"] + params["b_hh2"]).reshape(1, -1),
        "w1_t": params["w1"].T.astype(bf),                             # (E, E//2)
        "b_l1": params["b1"].reshape(1, -1),
        "w2_t": params["w2"].T.astype(bf),                             # (E//2, V)
        "b_out": params["b2"].reshape(1, -1),
    }


# ----------------------------------------------------------------------------
# ELMO forward
# ----------------------------------------------------------------------------
def elmo_forward(token_ids, prep):
    """token_ids: (B, T) int32 -> logits (B, T, vocab_size) f32."""
    B, T = token_ids.shape
    E = prep["embedding"].shape[1]
    H = prep["whh1_t"].shape[0]
    V = prep["w2_t"].shape[1]

    # Pad batch up to a sublane multiple of 8 so the per-step (B, H) matmuls
    # and scratch tiles are not degenerate.
    Bp = -(-B // 8) * 8
    if Bp != B:
        token_ids = jnp.pad(token_ids, ((0, Bp - B), (0, 0)))

    # Embedding gather directly in time-major order (transpose the tiny int32
    # id matrix instead of the activations).
    x = jnp.take(prep["embedding"], token_ids.T, axis=0)        # (T, Bp, E) f32

    # Hoisted layer-1 input projection: one big MXU matmul over all T*Bp rows.
    gx1 = dense_bias(x.reshape(T * Bp, E), prep["wih1_t"], prep["b1_comb"])
    gx1 = gx1.reshape(T, Bp, 4 * H)

    # Fused two-layer recurrence (only recurrent matmuls in the serial loop).
    h2 = lstm2_layers(gx1, prep["whh1_t"], prep["wih2_t"], prep["whh2_t"],
                      prep["b2_comb"])                          # (T, Bp, H)

    # Fused linear1 + linear_out, tiled over rows and vocab.
    logits = proj2(h2.reshape(T * Bp, H), prep["w1_t"], prep["b_l1"],
                   prep["w2_t"], prep["b_out"])                 # (T*Bp, V)

    return logits.reshape(T, Bp, V).transpose(1, 0, 2)[:B]      # (B, T, V)


# ----------------------------------------------------------------------------
# Pure-JAX reference.  mm_dtype=f32 reproduces the PyTorch f32 semantics;
# mm_dtype=bf16 mirrors the kernel's cast points (f32 accumulation/state).
# ----------------------------------------------------------------------------
def elmo_ref(token_ids, params, mm_dtype):
    def mm(a, b):
        return jnp.dot(a.astype(mm_dtype), b.astype(mm_dtype),
                       preferred_element_type=jnp.float32)

    def lstm(x_bte, w_ih, w_hh, b_ih, b_hh):
        B, _, _ = x_bte.shape
        H = w_hh.shape[1]

        def step(carry, x_t):
            h, c = carry
            gates = mm(x_t, w_ih.T) + mm(h, w_hh.T) + b_ih + b_hh
            i = jax.nn.sigmoid(gates[:, 0 * H:1 * H])
            f = jax.nn.sigmoid(gates[:, 1 * H:2 * H])
            g = jnp.tanh(gates[:, 2 * H:3 * H])
            o = jax.nn.sigmoid(gates[:, 3 * H:4 * H])
            c = f * c + i * g
            h = o * jnp.tanh(c)
            return (h, c), h

        init = (jnp.zeros((B, H), jnp.float32), jnp.zeros((B, H), jnp.float32))
        _, hs = jax.lax.scan(step, init, jnp.transpose(x_bte, (1, 0, 2)))
        return jnp.transpose(hs, (1, 0, 2))

    x = jnp.take(params["embedding"], token_ids, axis=0)
    x = lstm(x, params["w_ih1"], params["w_hh1"], params["b_ih1"], params["b_hh1"])
    x = lstm(x, params["w_ih2"], params["w_hh2"], params["b_ih2"], params["b_hh2"])
    h = mm(x, params["w1"].T) + params["b1"]
    return mm(h, params["w2"].T) + params["b2"]


# ----------------------------------------------------------------------------
# Deterministic parameter init (PyTorch-layout weights).
# ----------------------------------------------------------------------------
def init_params(key, vocab_size, embedding_dim):
    E = embedding_dim
    H = E
    Hh = E // 2
    ks = jax.random.split(key, 16)
    u = lambda k, shape, bound: jax.random.uniform(
        k, shape, jnp.float32, -bound, bound)
    lb = 1.0 / jnp.sqrt(H)
    return {
        "embedding": jax.random.normal(ks[0], (vocab_size, E), jnp.float32),
        "w_ih1": u(ks[1], (4 * H, E), lb), "w_hh1": u(ks[2], (4 * H, H), lb),
        "b_ih1": u(ks[3], (4 * H,), lb),   "b_hh1": u(ks[4], (4 * H,), lb),
        "w_ih2": u(ks[5], (4 * H, E), lb), "w_hh2": u(ks[6], (4 * H, H), lb),
        "b_ih2": u(ks[7], (4 * H,), lb),   "b_hh2": u(ks[8], (4 * H,), lb),
        "w1": u(ks[9], (Hh, E), 1.0 / jnp.sqrt(E)),
        "b1": u(ks[10], (Hh,), 1.0 / jnp.sqrt(E)),
        "w2": u(ks[11], (vocab_size, Hh), 1.0 / jnp.sqrt(Hh)),
        "b2": u(ks[12], (vocab_size,), 1.0 / jnp.sqrt(Hh)),
    }


if __name__ == "__main__":
    vocab_size = 256     # lane-aligned vocab for dense output stores
    embedding_dim = 128  # H = E = 128 -> gate slices land on 128-lane boundaries
    batch = 4            # exercises the pad-to-8 path
    seq = 10

    key = jax.random.PRNGKey(0)
    k_params, k_tokens = jax.random.split(key)
    params = init_params(k_params, vocab_size, embedding_dim)
    prep = prepare_params(params)
    token_ids = jax.random.randint(k_tokens, (batch, seq), 0, vocab_size,
                                   dtype=jnp.int32)

    logits = jax.block_until_ready(elmo_forward(token_ids, prep))
    ref_bf16 = jax.block_until_ready(elmo_ref(token_ids, params, jnp.bfloat16))
    ref_f32 = jax.block_until_ready(elmo_ref(token_ids, params, jnp.float32))

    assert logits.shape == (batch, seq, vocab_size)
    # Tight check vs a reference that mirrors the kernel's bf16 matmul casts.
    assert jnp.allclose(logits, ref_bf16, atol=2e-2, rtol=2e-2), \
        "mismatch vs bf16-matched reference"
    # Loose semantic check vs the full-f32 (PyTorch-equivalent) reference.
    assert jnp.allclose(logits, ref_f32, atol=1e-1, rtol=1e-1), \
        "mismatch vs f32 reference"
    print("KERNEL_OK")
</pallas_src>

<mosaic_0001>
module attributes {stable_mosaic.version = 11 : i64} {
  func.func @dense_kernel(%arg0: i32, %arg1: i32, %arg2: memref<80x128xf32, #tpu.memory_space<vmem>>, %arg3: memref<128x256xbf16, #tpu.memory_space<vmem>>, %arg4: memref<1x256xf32, #tpu.memory_space<vmem>>, %arg5: memref<80x256xf32, #tpu.memory_space<vmem>>) attributes {dimension_semantics = [#tpu.dimension_semantics<parallel>, #tpu.dimension_semantics<parallel>], iteration_bounds = array<i64: 1, 2>, scalar_prefetch = 0 : i64, scratch_operands = 0 : i64, tpu.core_type = #tpu.core_type<tc>, window_params = [{transform_indices = @transform_0, window_bounds = array<i64: 80, 128>}, {transform_indices = @transform_1, window_bounds = array<i64: 128, 256>}, {transform_indices = @transform_2, window_bounds = array<i64: 1, 256>}, {transform_indices = @transform_3, window_bounds = array<i64: 80, 256>}]} {
    %c0 = arith.constant 0 : index
    %c0_0 = arith.constant 0 : index
    %0 = vector.load %arg2[%c0, %c0_0] : memref<80x128xf32, #tpu.memory_space<vmem>>, vector<80x128xf32>
    %1 = arith.truncf %0 : vector<80x128xf32> to vector<80x128xbf16>
    %c0_1 = arith.constant 0 : index
    %c0_2 = arith.constant 0 : index
    %2 = vector.load %arg3[%c0_1, %c0_2] : memref<128x256xbf16, #tpu.memory_space<vmem>>, vector<128x256xbf16>
    %cst = arith.constant dense<0.000000e+00> : vector<80x256xf32>
    %3 = tpu.matmul %1, %2, %cst {dimension_numbers = #tpu.dot_dimension_numbers<[1], [0], [0], [1], [0, 0, 1, 1], [], []>} : vector<80x128xbf16>, vector<128x256xbf16>, vector<80x256xf32> -> vector<80x256xf32>
    %c0_3 = arith.constant 0 : index
    %c0_4 = arith.constant 0 : index
    %4 = vector.load %arg4[%c0_3, %c0_4] : memref<1x256xf32, #tpu.memory_space<vmem>>, vector<1x256xf32>
    %5 = vector.broadcast %4 : vector<1x256xf32> to vector<80x256xf32>
    %6 = arith.addf %3, %5 : vector<80x256xf32>
    %c0_5 = arith.constant 0 : index
    %c0_6 = arith.constant 0 : index
    %7 = vector.load %arg5[%c0_5, %c0_6] : memref<80x256xf32, #tpu.memory_space<vmem>>, vector<80x256xf32>
    tpu.vector_store %arg5[%c0_5, %c0_6], %6 {strides = array<i32>} : memref<80x256xf32, #tpu.memory_space<vmem>>, vector<80x256xf32>,
    return
  }
  func.func @transform_0(%arg0: i32, %arg1: i32) -> (i32, i32) {
    %c0_i32 = arith.constant 0 : i32
    %c0_i32_0 = arith.constant 0 : i32
    return %arg0, %c0_i32 : i32, i32
  }
  func.func @transform_1(%arg0: i32, %arg1: i32) -> (i32, i32) {
    %c0_i32 = arith.constant 0 : i32
    %c0_i32_0 = arith.constant 0 : i32
    return %c0_i32, %arg1 : i32, i32
  }
  func.func @transform_2(%arg0: i32, %arg1: i32) -> (i32, i32) {
    %c0_i32 = arith.constant 0 : i32
    %c0_i32_0 = arith.constant 0 : i32
    return %c0_i32, %arg1 : i32, i32
  }
  func.func @transform_3(%arg0: i32, %arg1: i32) -> (i32, i32) {
    %c0_i32 = arith.constant 0 : i32
    return %arg0, %arg1 : i32, i32
  }
}

</mosaic_0001>

<llo_original>
// kernel: tpu_custom_call.1
$region0: #{tpu_custom_call.1}
  #allocation0 [shape = 'u32[]', space=smem, size = 0x4, offset = 0x4, fixed_abs, tag = 'smem constant byte address 0x4 - core index']
  #allocation1 [shape = 'u32[144,128]{1,0:T(1,128)}', space=vmem, size = 0x12000, scoped, tag = 'internal scratch']
  %s0 = inlined_call_operand.hbm [shape: f32[80,128], index: 0, kind: input, shape index: {}]
  %s1 = inlined_call_operand.hbm [shape: bf16[128,512], index: 1, kind: input, shape index: {}]
  %s2 = inlined_call_operand.hbm [shape: f32[1,512], index: 2, kind: input, shape index: {}]
  %s3 = inlined_call_operand.hbm [shape: f32[80,512], index: 3, kind: output, shape index: {}]
  %s4 = sld [smem:[#allocation0]]
  $region57: #{tpu_custom_call.1} parent=0
    _
  %s6 = ssub.s32 1, %s4
  %s7 = scalar_select 0, %s6, %s4
  $region1: #{tpu_custom_call.1} parent=0
    #allocation2 [shape = 'u8[40960]{0}', space=vmem, size = 0xa000, scoped, tag = 'input window, operand 0, single buffered']
    #allocation3 [shape = 's32[2]{0}', space=sflag, size = 0x8, scoped, tag = 'scoped memory for tpu_custom_call.1']
    #allocation4 [shape = 's32[2]{0}', space=sflag, size = 0x8, scoped, tag = 'scoped memory for tpu_custom_call.1']
    #allocation5 [shape = 'u8[131072]{0}', space=vmem, size = 0x20000, scoped, tag = 'input window, operand 1']
    #allocation6 [shape = 's32[2]{0}', space=sflag, size = 0x8, scoped, tag = 'scoped memory for tpu_custom_call.1']
    #allocation7 [shape = 'u8[2048]{0}', space=vmem, size = 0x800, scoped, tag = 'input window, operand 2']
    #allocation8 [shape = 'u8[163840]{0}', space=vmem, size = 0x28000, scoped, tag = 'output window, operand 0']
    %8 = vsyncpa [#allocation3], 0
    %9 = vsyncpa [#allocation6], 0
    %s10 = scalar_lea.sflag [#allocation6], 1
    %11 = vsyncpa %s10, 0
    %12 = vsyncpa [#allocation4], 0
    %s13 = scalar_lea.sflag [#allocation4], 1
    %14 = vsyncpa %s13, 0
    loop: start=0, step=1, limit=4
    $region2: #{tpu_custom_call.1} parent=1 // loop_pre_header
      _
    $region3: #{tpu_custom_call.1} parent=1 // loop_header
      %s16 = sphi 0, %s20
      %p17 = scmp.ge.s32.totalorder %s16, 4
      %s23 = sphi 0, %s35
      %s24 = sphi 0, %s31
      %s25 = sphi 0, %s23
      %s26 = sphi 0, %s24
      %s27 = sphi 0, %s25
      %s28 = sphi 0, %s26
      %s38 = sphi 0, %s40
      %s41 = sphi 0, %s38
      %s42 = sphi 0, %s41
      %s58 = sphi 0, %s42
      %s64 = sphi 0, %s66
      %s67 = sphi 0, %s64
      %s68 = sphi 0, %s67
      %s84 = sphi 0, %s68
      %s90 = sphi 0, %s92
      %s93 = sphi 0, %s90
      %s94 = sphi 0, %s93
      %s110 = sphi 0, %s94
      %s118 = sphi 0, %s120
      %s121 = sphi 0, %s118
      %s122 = sphi 0, %s121
      %s138 = sphi 0, %s122
    $region4: #{tpu_custom_call.1} parent=1 // loop_header_branch
      %19 = sbr.rel (%p17) target = $region8
    $region5: #{tpu_custom_call.1} parent=1 // loop_body
      %s21 = ssub.s32 %s16, 1
      %s22 = ssub.s32 %s16, 2
      %s29 = sadd.s32 1, %s24
      %p30 = scmp.ge.s32.totalorder %s29, 2
      %s31 = scalar_select %p30, 0, %s29
      %s32 = sadd.s32 1, %s23
      %s33 = scalar_select %p30, %s32, %s23
      %p34 = scmp.ge.s32.totalorder %s33, 1
      %s35 = scalar_select %p34, 0, %s33
      %s36 = ssub.s32 %s23, %s35
      %p37 = scmp.eq.s32.totalorder %s36, 0
      %s39 = sadd.s32 %s38, 1
      %s40 = scalar_select %p37, %s38, %s39
      %p43 = pneg %p37
      %p44 = scmp.eq.s32.totalorder %s16, 1
      %p45 = por %p43, %p44
      %p46 = scmp.ne.s32.totalorder %s38, %s41
      %p47 = scmp.eq.s32.totalorder %s16, 0
      %p48 = por %p46, %p47
      %p49 = scmp.ne.s32.totalorder %s38, %s41
      %p50 = scmp.eq.s32.totalorder %s21, 1
      %p51 = por %p49, %p50
      %p52 = scmp.ne.s32.totalorder %s41, %s42
      %p53 = scmp.eq.s32.totalorder %s21, 0
      %p54 = por %p52, %p53
      %p55 = scmp.ne.s32.totalorder %s41, %s42
      %p56 = scmp.eq.s32.totalorder %s22, 1
      %p57 = por %p55, %p56
      %p59 = scmp.ne.s32.totalorder %s42, %s58
      %p60 = scmp.eq.s32.totalorder %s22, 0
      %p61 = por %p59, %p60
      %s62 = ssub.s32 %s24, %s31
      %p63 = scmp.eq.s32.totalorder %s62, 0
      %s65 = sadd.s32 %s64, 1
      %s66 = scalar_select %p63, %s64, %s65
      %p69 = pneg %p63
      %p70 = scmp.eq.s32.totalorder %s16, 1
      %p71 = por %p69, %p70
      %p72 = scmp.ne.s32.totalorder %s64, %s67
      %p73 = scmp.eq.s32.totalorder %s16, 0
      %p74 = por %p72, %p73
      %p75 = scmp.ne.s32.totalorder %s64, %s67
      %p76 = scmp.eq.s32.totalorder %s21, 1
      %p77 = por %p75, %p76
      %p78 = scmp.ne.s32.totalorder %s67, %s68
      %p79 = scmp.eq.s32.totalorder %s21, 0
      %p80 = por %p78, %p79
      %p81 = scmp.ne.s32.totalorder %s67, %s68
      %p82 = scmp.eq.s32.totalorder %s22, 1
      %p83 = por %p81, %p82
      %p85 = scmp.ne.s32.totalorder %s68, %s84
      %p86 = scmp.eq.s32.totalorder %s22, 0
      %p87 = por %p85, %p86
      %s88 = ssub.s32 %s24, %s31
      %p89 = scmp.eq.s32.totalorder %s88, 0
      %s91 = sadd.s32 %s90, 1
      %s92 = scalar_select %p89, %s90, %s91
      %p95 = pneg %p89
      %p96 = scmp.eq.s32.totalorder %s16, 1
      %p97 = por %p95, %p96
      %p98 = scmp.ne.s32.totalorder %s90, %s93
      %p99 = scmp.eq.s32.totalorder %s16, 0
      %p100 = por %p98, %p99
      %p101 = scmp.ne.s32.totalorder %s90, %s93
      %p102 = scmp.eq.s32.totalorder %s21, 1
      %p103 = por %p101, %p102
      %p104 = scmp.ne.s32.totalorder %s93, %s94
      %p105 = scmp.eq.s32.totalorder %s21, 0
      %p106 = por %p104, %p105
      %p107 = scmp.ne.s32.totalorder %s93, %s94
      %p108 = scmp.eq.s32.totalorder %s22, 1
      %p109 = por %p107, %p108
      %p111 = scmp.ne.s32.totalorder %s94, %s110
      %p112 = scmp.eq.s32.totalorder %s22, 0
      %p113 = por %p111, %p112
      %s114 = ssub.s32 %s23, %s35
      %s115 = ssub.s32 %s24, %s31
      %s116 = sor.u32 %s114, %s115
      %p117 = scmp.eq.s32.totalorder %s116, 0
      %s119 = sadd.s32 %s118, 1
      %s120 = scalar_select %p117, %s118, %s119
      %p123 = pneg %p117
      %p124 = scmp.eq.s32.totalorder %s16, 1
      %p125 = por %p123, %p124
      %p126 = scmp.ne.s32.totalorder %s118, %s121
      %p127 = scmp.eq.s32.totalorder %s16, 0
      %p128 = por %p126, %p127
      %p129 = scmp.ne.s32.totalorder %s118, %s121
      %p130 = scmp.eq.s32.totalorder %s21, 1
      %p131 = por %p129, %p130
      %p132 = scmp.ne.s32.totalorder %s121, %s122
      %p133 = scmp.eq.s32.totalorder %s21, 0
      %p134 = por %p132, %p133
      %p135 = scmp.ne.s32.totalorder %s121, %s122
      %p136 = scmp.eq.s32.totalorder %s22, 1
      %p137 = por %p135, %p136
      %p139 = scmp.ne.s32.totalorder %s122, %s138
      %p140 = scmp.eq.s32.totalorder %s22, 0
      %p141 = por %p139, %p140
      %p142 = scmp.le.s32.totalorder 1, %s16
      %p143 = scmp.lt.s32.totalorder %s16, 3
      %p144 = pnand %p142, %p143
      %p145 = pneg %p144
      // Predicated region
      $region9: #{tpu_custom_call.1} parent=5 // pred_check
        _
      $region10: #{tpu_custom_call.1} parent=5 // pred_check_branch
        %147 = sbr.rel (%p144) target = $region12
      $region11: #{tpu_custom_call.1} parent=5 // pred_region
        %s148 = ssub.s32 %s16, 1
        // Predicated region
        $region13: #{tpu_custom_call.1} parent=11 // pred_check
          %p149 = pneg %p54
        $region14: #{tpu_custom_call.1} parent=11 // pred_check_branch
          %151 = sbr.rel (%p149) target = $region16
        $region15: #{tpu_custom_call.1} parent=11 // pred_region
          %s152 = smul.u32 10, %s25
          %s154 = ssub.s32 1280, 1280
          %155 = vsyncadd [#allocation3], %s154
          %s156 = smul.addr %s152, 128
          %s157 = scalar_lea.hbm %s0, %s156
          %s158 = sshll.u32 [#allocation2], 4
          %s159 = int_to_ptr.vmem [resolvable:$true] %s158
          %164 = dma.hbm_to_vmem [thread:$0]  %s157, 1280, %s159, [#allocation3], 128, 128, 8
        $region16: #{tpu_custom_call.1} parent=11 // pred_fallthru
          _
      $region12: #{tpu_custom_call.1} parent=5 // pred_fallthru
        _
      %p165 = scmp.lt.s32.totalorder %s16, 2
      // Predicated region
      $region17: #{tpu_custom_call.1} parent=5 // pred_check
        %p166 = pneg %p165
      $region18: #{tpu_custom_call.1} parent=5 // pred_check_branch
        %168 = sbr.rel (%p166) target = $region20
      $region19: #{tpu_custom_call.1} parent=5 // pred_region
        // Predicated region
        $region21: #{tpu_custom_call.1} parent=19 // pred_check
          %p169 = pneg %p74
        $region22: #{tpu_custom_call.1} parent=19 // pred_check_branch
          %171 = sbr.rel (%p169) target = $region24
        $region23: #{tpu_custom_call.1} parent=19 // pred_region
          %s172 = sand.u32 %s16, 1
          %s173 = scalar_lea.sflag [#allocation6], %s172
          %s174 = sand.u32 %s64, 1
          %s175 = smul.addr %s174, 128
          %s176 = scalar_lea.vmem [#allocation5], %s175
          %s177 = smul.u32 2, %s24
          %s179 = ssub.s32 2048, 2048
          %180 = vsyncadd %s173, %s179
          %s181 = smul.addr %s177, 64
          %s182 = scalar_lea.hbm %s1, %s181
          %s183 = sshll.u32 %s176, 4
          %s184 = int_to_ptr.vmem [resolvable:$true] %s183
          %189 = dma.hbm_to_vmem [thread:$0]  %s182, 2048, %s184, %s173, 256, 128, 8
        $region24: #{tpu_custom_call.1} parent=19 // pred_fallthru
          _
        // Predicated region
        $region25: #{tpu_custom_call.1} parent=19 // pred_check
          %p190 = pneg %p100
        $region26: #{tpu_custom_call.1} parent=19 // pred_check_branch
          %192 = sbr.rel (%p190) target = $region28
        $region27: #{tpu_custom_call.1} parent=19 // pred_region
          %s193 = sand.u32 %s16, 1
          %s194 = scalar_lea.sflag [#allocation6], %s193
          %s195 = sand.u32 %s90, 1
          %s196 = smul.addr %s195, 2
          %s197 = scalar_lea.vmem [#allocation7], %s196
          %s198 = smul.u32 2, %s24
          %s200 = ssub.s32 32, 32
          %201 = vsyncadd %s194, %s200
          %s202 = smul.addr %s198, 16
          %s203 = scalar_lea.hbm %s2, %s202
          %s205 = sshll.u32 %s197, 4
          %s206 = int_to_ptr.vmem [resolvable:$true] %s205
          %208 = dma.hbm_to_vmem [thread:$0]  %s203, 32, %s206, %s194
        $region28: #{tpu_custom_call.1} parent=19 // pred_fallthru
          _
      $region20: #{tpu_custom_call.1} parent=5 // pred_fallthru
        _
      %p209 = scmp.le.s32.totalorder 1, %s16
      %p210 = scmp.lt.s32.totalorder %s16, 3
      %p211 = pnand %p209, %p210
      %p212 = pneg %p211
      // Predicated region
      $region29: #{tpu_custom_call.1} parent=5 // pred_check
        _
      $region30: #{tpu_custom_call.1} parent=5 // pred_check_branch
        %214 = sbr.rel (%p211) target = $region32
      $region31: #{tpu_custom_call.1} parent=5 // pred_region
        %s215 = ssub.s32 %s16, 1
        // Predicated region
        $region33: #{tpu_custom_call.1} parent=31 // pred_check
          %p216 = pneg %p54
        $region34: #{tpu_custom_call.1} parent=31 // pred_check_branch
          %218 = sbr.rel (%p216) target = $region36
        $region35: #{tpu_custom_call.1} parent=31 // pred_region
          %219 = dma.done [#allocation3], 1280
        $region36: #{tpu_custom_call.1} parent=31 // pred_fallthru
          _
        %s220 = sand.u32 %s21, 1
        %s221 = scalar_lea.sflag [#allocation6], %s220
        %s222 = sand.u32 %s67, 1
        %s223 = smul.addr %s222, 128
        %s224 = scalar_lea.vmem [#allocation5], %s223
        // Predicated region
        $region37: #{tpu_custom_call.1} parent=31 // pred_check
          %p225 = pneg %p80
        $region38: #{tpu_custom_call.1} parent=31 // pred_check_branch
          %227 = sbr.rel (%p225) target = $region40
        $region39: #{tpu_custom_call.1} parent=31 // pred_region
          %228 = dma.done %s221, 2048
        $region40: #{tpu_custom_call.1} parent=31 // pred_fallthru
          _
        %s229 = sand.u32 %s21, 1
        %s230 = scalar_lea.sflag [#allocation6], %s229
        %s231 = sand.u32 %s93, 1
        %s232 = smul.addr %s231, 2
        %s233 = scalar_lea.vmem [#allocation7], %s232
        // Predicated region
        $region41: #{tpu_custom_call.1} parent=31 // pred_check
          %p234 = pneg %p106
        $region42: #{tpu_custom_call.1} parent=31 // pred_check_branch
          %236 = sbr.rel (%p234) target = $region44
        $region43: #{tpu_custom_call.1} parent=31 // pred_region
          %237 = dma.done %s230, 32
        $region44: #{tpu_custom_call.1} parent=31 // pred_fallthru
          _
        %p238 = pneg %p54
        %p239 = pneg %p51
        %s240 = sand.u32 %s21, 1
        %s241 = scalar_lea.sflag [#allocation6], %s240
        %s242 = sand.u32 %s67, 1
        %s243 = smul.addr %s242, 128
        %s244 = scalar_lea.vmem [#allocation5], %s243
        %p245 = pneg %p80
        %p246 = pneg %p77
        %s247 = sand.u32 %s21, 1
        %s248 = scalar_lea.sflag [#allocation6], %s247
        %s249 = sand.u32 %s93, 1
        %s250 = smul.addr %s249, 2
        %s251 = scalar_lea.vmem [#allocation7], %s250
        %p252 = pneg %p106
        %p253 = pneg %p103
        %p254 = pneg %p134
        %p255 = pneg %p131
        %s256 = sand.u32 %s121, 1
        %s257 = scalar_lea.sflag [#allocation4], %s256
        %s258 = sand.u32 %s121, 1
        %s259 = smul.addr %s258, 160
        %s260 = scalar_lea.vmem [#allocation8], %s259
        %s261 = smul.u32 10, %s25
        %s262 = smul.u32 2, %s26
        %s263 = smul.u32 2, %s26
        %s264 = smul.u32 10, %s25
        %s265 = smul.u32 2, %s26
        %v267 = vld [vmem:[#allocation2] sm:$0xff]
        %v268 = vld [vmem:[#allocation2 + $0x8] sm:$0xff]
        %v269 = vld [vmem:[#allocation2 + $0x10] sm:$0xff]
        %v270 = vld [vmem:[#allocation2 + $0x18] sm:$0xff]
        %v271 = vld [vmem:[#allocation2 + $0x20] sm:$0xff]
        %v272 = vld [vmem:[#allocation2 + $0x28] sm:$0xff]
        %v273 = vld [vmem:[#allocation2 + $0x30] sm:$0xff]
        %v274 = vld [vmem:[#allocation2 + $0x38] sm:$0xff]
        %v275 = vld [vmem:[#allocation2 + $0x40] sm:$0xff]
        %v276 = vld [vmem:[#allocation2 + $0x48] sm:$0xff]
        %v277 = vpack.c.bf16 %v268, %v267
        %v278 = vpack.c.bf16 %v270, %v269
        %v279 = vpack.c.bf16 %v272, %v271
        %v280 = vpack.c.bf16 %v274, %v273
        %v281 = vpack.c.bf16 %v276, %v275
        %v282 = vld [vmem:[%s224] sm:$0xff]
        %v283 = vld [vmem:[%s224 + $0x8] sm:$0xff]
        %v284 = vld [vmem:[%s224 + $0x10] sm:$0xff]
        %v285 = vld [vmem:[%s224 + $0x18] sm:$0xff]
        %v286 = vld [vmem:[%s224 + $0x20] sm:$0xff]
        %v287 = vld [vmem:[%s224 + $0x28] sm:$0xff]
        %v288 = vld [vmem:[%s224 + $0x30] sm:$0xff]
        %v289 = vld [vmem:[%s224 + $0x38] sm:$0xff]
        %v290 = vld [vmem:[%s224 + $0x40] sm:$0xff]
        %v291 = vld [vmem:[%s224 + $0x48] sm:$0xff]
        %v292 = vld [vmem:[%s224 + $0x50] sm:$0xff]
        %v293 = vld [vmem:[%s224 + $0x58] sm:$0xff]
        %v294 = vld [vmem:[%s224 + $0x60] sm:$0xff]
        %v295 = vld [vmem:[%s224 + $0x68] sm:$0xff]
        %v296 = vld [vmem:[%s224 + $0x70] sm:$0xff]
        %v297 = vld [vmem:[%s224 + $0x78] sm:$0xff]
        %v298 = vld [vmem:[%s233] sm:$0x3]
        %v300 = vlaneseq
        %v301 = vshrl.u32 %v300, 7
        %v302 = vsub.s32 0, %v301
        %v303 = vrot.slane %v298, %v302
        %v304 = vlaneseq
        %v305 = vshrl.u32 %v304, 7
        %v306 = vsub.s32 1, %v305
        %v307 = vrot.slane %v298, %v306
        %v326 = vunpack.c.l.b16 %v282
        %v327 = vunpack.c.h.b16 %v282
        %v328 = vunpack.c.l.b16 %v283
        %v329 = vunpack.c.h.b16 %v283
        %v330 = vunpack.c.l.b16 %v284
        %v331 = vunpack.c.h.b16 %v284
        %v332 = vunpack.c.l.b16 %v285
        %v333 = vunpack.c.h.b16 %v285
        %v334 = vunpack.c.l.b16 %v286
        %v335 = vunpack.c.h.b16 %v286
        %v336 = vunpack.c.l.b16 %v287
        %v337 = vunpack.c.h.b16 %v287
        %v338 = vunpack.c.l.b16 %v288
        %v339 = vunpack.c.h.b16 %v288
        %v340 = vunpack.c.l.b16 %v289
        %v341 = vunpack.c.h.b16 %v289
        %v342 = vunpack.c.l.b16 %v290
        %v343 = vunpack.c.h.b16 %v290
        %v344 = vunpack.c.l.b16 %v291
        %v345 = vunpack.c.h.b16 %v291
        %v346 = vunpack.c.l.b16 %v292
        %v347 = vunpack.c.h.b16 %v292
        %v348 = vunpack.c.l.b16 %v293
        %v349 = vunpack.c.h.b16 %v293
        %v350 = vunpack.c.l.b16 %v294
        %v351 = vunpack.c.h.b16 %v294
        %v352 = vunpack.c.l.b16 %v295
        %v353 = vunpack.c.h.b16 %v295
        %v354 = vunpack.c.l.b16 %v296
        %v355 = vunpack.c.h.b16 %v296
        %v356 = vunpack.c.l.b16 %v297
        %v357 = vunpack.c.h.b16 %v297
        %v358 = vpack.c.b16 %v328, %v326
        %v359 = vpack.c.b16 %v329, %v327
        %v360 = vpack.c.b16 %v332, %v330
        %v361 = vpack.c.b16 %v333, %v331
        %v362 = vpack.c.b16 %v336, %v334
        %v363 = vpack.c.b16 %v337, %v335
        %v364 = vpack.c.b16 %v340, %v338
        %v365 = vpack.c.b16 %v341, %v339
        %v366 = vpack.c.b16 %v344, %v342
        %v367 = vpack.c.b16 %v345, %v343
        %v368 = vpack.c.b16 %v348, %v346
        %v369 = vpack.c.b16 %v349, %v347
        %v370 = vpack.c.b16 %v352, %v350
        %v371 = vpack.c.b16 %v353, %v351
        %v372 = vpack.c.b16 %v356, %v354
        %v373 = vpack.c.b16 %v357, %v355
        %390 = vmatprep.subr.bf16.mxu0 %v373
        %391 = vmatpush1.bf16.msra.mxu0 %v372
        %392 = vmatprep.subr.bf16.mxu0 %v371
        %393 = vmatpush1.bf16.msra.mxu0 %v370
        %394 = vmatprep.subr.bf16.mxu0 %v369
        %395 = vmatpush1.bf16.msra.mxu0 %v368
        %396 = vmatprep.subr.bf16.mxu0 %v367
        %397 = vmatpush1.bf16.msra.mxu0 %v366
        %398 = vmatprep.subr.bf16.mxu0 %v365
        %399 = vmatpush1.bf16.msra.mxu0 %v364
        %400 = vmatprep.subr.bf16.mxu0 %v363
        %401 = vmatpush1.bf16.msra.mxu0 %v362
        %402 = vmatprep.subr.bf16.mxu0 %v361
        %403 = vmatpush1.bf16.msra.mxu0 %v360
        %404 = vmatprep.subr.bf16.mxu0 %v359
        %405 = vmatpush1.bf16.msra.mxu0 %v358
        %406 = vmatprep.subr.bf16.mxu0 0
        %407 = vmatpush2.bf16.msra.mxu0 0
        %408 = vmatprep.subr.bf16.mxu0 0
        %409 = vmatpush2.bf16.msra.mxu0 0
        %410 = vmatprep.subr.bf16.mxu0 0
        %411 = vmatpush2.bf16.msra.mxu0 0
        %412 = vmatprep.subr.bf16.mxu0 0
        %413 = vmatpush2.bf16.msra.mxu0 0
        %414 = vmatprep.subr.bf16.mxu0 0
        %415 = vmatpush2.bf16.msra.mxu0 0
        %416 = vmatprep.subr.bf16.mxu0 0
        %417 = vmatpush2.bf16.msra.mxu0 0
        %418 = vmatprep.subr.bf16.mxu0 0
        %419 = vmatpush2.bf16.msra.mxu0 0
        %420 = vmatprep.subr.bf16.mxu0 0
        %421 = vmatpush2.bf16.msra.mxu0 0
        %422 = vmatprep.mubr.bf16.mxu0 0
        %423 = vmatmul.mubr.bf16.gmra.mxu0 %v277
        %v424 = vpop.f32.mrf.mxu0
        %v425 = vadd.f32 %v303, %v424
        %v426 = vpop.f32.mrf.mxu0
        %v427 = vadd.f32 %v307, %v426
        %v428 = vpop.f32.mrf.mxu0
        %v429 = vadd.f32 %v303, %v428
        %v430 = vpop.f32.mrf.mxu0
        %v431 = vadd.f32 %v307, %v430
        %432 = vmatprep.mubr.bf16.mxu0 0
        %433 = vmatmul.mubr.bf16.gmra.mxu0 %v278
        %v434 = vpop.f32.mrf.mxu0
        %v435 = vadd.f32 %v303, %v434
        %v436 = vpop.f32.mrf.mxu0
        %v437 = vadd.f32 %v307, %v436
        %v438 = vpop.f32.mrf.mxu0
        %v439 = vadd.f32 %v303, %v438
        %v440 = vpop.f32.mrf.mxu0
        %v441 = vadd.f32 %v307, %v440
        %442 = vmatprep.mubr.bf16.mxu0 0
        %443 = vmatmul.mubr.bf16.gmra.mxu0 %v279
        %v444 = vpop.f32.mrf.mxu0
        %v445 = vadd.f32 %v303, %v444
        %v446 = vpop.f32.mrf.mxu0
        %v447 = vadd.f32 %v307, %v446
        %v448 = vpop.f32.mrf.mxu0
        %v449 = vadd.f32 %v303, %v448
        %v450 = vpop.f32.mrf.mxu0
        %v451 = vadd.f32 %v307, %v450
        %452 = vmatprep.mubr.bf16.mxu0 0
        %453 = vmatmul.mubr.bf16.gmra.mxu0 %v280
        %v454 = vpop.f32.mrf.mxu0
        %v455 = vadd.f32 %v303, %v454
        %v456 = vpop.f32.mrf.mxu0
        %v457 = vadd.f32 %v307, %v456
        %v458 = vpop.f32.mrf.mxu0
        %v459 = vadd.f32 %v303, %v458
        %v460 = vpop.f32.mrf.mxu0
        %v461 = vadd.f32 %v307, %v460
        %462 = vmatprep.mubr.bf16.mxu0 0
        %463 = vmatmul.mubr.bf16.gmra.mxu0 %v281
        %v464 = vpop.f32.mrf.mxu0
        %v465 = vadd.f32 %v303, %v464
        %v466 = vpop.f32.mrf.mxu0
        %v467 = vadd.f32 %v307, %v466
        %v468 = vpop.f32.mrf.mxu0
        %v469 = vadd.f32 %v303, %v468
        %v470 = vpop.f32.mrf.mxu0
        %v471 = vadd.f32 %v307, %v470
        %472 = vdwg.mxu0
        %473 = vst [vmem:[%s260] sm:$0xff] %v425
        %474 = vst [vmem:[%s260 + $0x8] sm:$0xff] %v427
        %475 = vst [vmem:[%s260 + $0x10] sm:$0xff] %v429
        %476 = vst [vmem:[%s260 + $0x18] sm:$0xff] %v431
        %477 = vst [vmem:[%s260 + $0x20] sm:$0xff] %v435
        %478 = vst [vmem:[%s260 + $0x28] sm:$0xff] %v437
        %479 = vst [vmem:[%s260 + $0x30] sm:$0xff] %v439
        %480 = vst [vmem:[%s260 + $0x38] sm:$0xff] %v441
        %481 = vst [vmem:[%s260 + $0x40] sm:$0xff] %v445
        %482 = vst [vmem:[%s260 + $0x48] sm:$0xff] %v447
        %483 = vst [vmem:[%s260 + $0x50] sm:$0xff] %v449
        %484 = vst [vmem:[%s260 + $0x58] sm:$0xff] %v451
        %485 = vst [vmem:[%s260 + $0x60] sm:$0xff] %v455
        %486 = vst [vmem:[%s260 + $0x68] sm:$0xff] %v457
        %487 = vst [vmem:[%s260 + $0x70] sm:$0xff] %v459
        %488 = vst [vmem:[%s260 + $0x78] sm:$0xff] %v461
        %489 = vst [vmem:[%s260 + $0x80] sm:$0xff] %v465
        %490 = vst [vmem:[%s260 + $0x88] sm:$0xff] %v467
        %491 = vst [vmem:[%s260 + $0x90] sm:$0xff] %v469
        %492 = vst [vmem:[%s260 + $0x98] sm:$0xff] %v471
        %s493 = sand.u32 %s121, 1
        %s494 = scalar_lea.sflag [#allocation4], %s493
        %s495 = sand.u32 %s121, 1
        %s496 = smul.addr %s495, 160
        %s497 = scalar_lea.vmem [#allocation8], %s496
        // Predicated region
        $region45: #{tpu_custom_call.1} parent=31 // pred_check
          %p498 = pneg %p131
        $region46: #{tpu_custom_call.1} parent=31 // pred_check_branch
          %500 = sbr.rel (%p498) target = $region48
        $region47: #{tpu_custom_call.1} parent=31 // pred_region
          %s501 = smul.u32 10, %s25
          %s502 = smul.u32 2, %s26
          %s504 = ssub.s32 2560, 2560
          %505 = vsyncadd %s494, %s504
          %s506 = smul.addr %s501, 4
          %s507 = sadd.s32 %s502, %s506
          %s508 = smul.addr %s507, 128
          %s509 = scalar_lea.hbm %s3, %s508
          %s510 = sshll.u32 %s497, 4
          %s511 = int_to_ptr.vmem [resolvable:$true] %s510
          %516 = dma.vmem_to_hbm [thread:$0]  %s511, 2560, %s509, %s494, 256, 512, 16
        $region48: #{tpu_custom_call.1} parent=31 // pred_fallthru
          _
      $region32: #{tpu_custom_call.1} parent=5 // pred_fallthru
        _
      %p517 = scmp.le.s32.totalorder 2, %s16
      // Predicated region
      $region49: #{tpu_custom_call.1} parent=5 // pred_check
        %p518 = pneg %p517
      $region50: #{tpu_custom_call.1} parent=5 // pred_check_branch
        %520 = sbr.rel (%p518) target = $region52
      $region51: #{tpu_custom_call.1} parent=5 // pred_region
        %s521 = ssub.s32 %s16, 2
        // Predicated region
        $region53: #{tpu_custom_call.1} parent=51 // pred_check
          %p522 = pneg %p137
        $region54: #{tpu_custom_call.1} parent=51 // pred_check_branch
          %524 = sbr.rel (%p522) target = $region56
        $region55: #{tpu_custom_call.1} parent=51 // pred_region
          %s525 = sand.u32 %s122, 1
          %s526 = scalar_lea.sflag [#allocation4], %s525
          %s527 = sand.u32 %s122, 1
          %s528 = smul.addr %s527, 160
          %s529 = scalar_lea.vmem [#allocation8], %s528
          %530 = dma.done %s526, 2560
        $region56: #{tpu_custom_call.1} parent=51 // pred_fallthru
          _
      $region52: #{tpu_custom_call.1} parent=5 // pred_fallthru
        _
    $region6: #{tpu_custom_call.1} parent=1 // loop_footer
      %s20 = sadd.s32 1, %s16
    $region7: #{tpu_custom_call.1} parent=1 // loop_footer_branch
      %15 = sbr.rel target = $region3
    $region8: #{tpu_custom_call.1} parent=1 // loop_exit
      _
    %531 = vsyncpa [#allocation3], 1
    %s532 = scalar_lea.sflag [#allocation3], 1
    %533 = vsyncpa %s532, 1
    %534 = vsyncpa [#allocation6], 1
    %s535 = scalar_lea.sflag [#allocation6], 1
    %536 = vsyncpa %s535, 1
    %537 = vsyncpa [#allocation4], 1
    %s538 = scalar_lea.sflag [#allocation4], 1
    %539 = vsyncpa %s538, 1

</llo_original>
